<compile_context>
chip_gen: v6e
topology: v6e:2x2x1
jax: 0.10.0
libtpu: 0.0.40
codegen_flags: <defaults>
</compile_context>

<pallas_src>
import jax
import jax.numpy as jnp
from jax.experimental import pallas as pl
from jax.experimental.pallas import tpu as pltpu


_SMALL_BYTES = 1 << 20  # below this, a pallas_call launch costs more than it moves


def _squeeze_dma_copy_kernel(x_hbm_ref, o_hbm_ref, sem):
    """Whole-buffer HBM -> HBM DMA: no VMEM staging, no vld/vst body."""
    copy = pltpu.make_async_copy(x_hbm_ref, o_hbm_ref, sem)
    copy.start()
    copy.wait()


def _choose_lane_width(total):
    """Largest lane-dense width (multiple of 128) that divides `total`."""
    for c in (1024, 512, 256, 128):
        if total % c == 0:
            return c
    return None


def nn_squeeze(x, *, force_kernel=False):
    """Pallas equivalent of `torch.squeeze(x)` (remove all size-1 dims)."""
    squeezed_shape = tuple(int(d) for d in x.shape if d != 1)
    total = int(x.size)
    itemsize = jnp.dtype(x.dtype).itemsize

    # Degenerate empty tensor: nothing to copy, ever.
    if total == 0:
        return x.reshape(squeezed_shape)

    # Fast path: squeeze is metadata-only.  For the tiny (N, C, 1, 1) CIDA
    # tensors (and any odd-sized input) a reshape beats any kernel launch.
    if not force_kernel and (total % 128 != 0 or total * itemsize < _SMALL_BYTES):
        return x.reshape(squeezed_shape)

    # Present the flat buffer to the DMA as a lane-dense 2D slab when possible
    # (purely cosmetic for a contiguous whole-ref copy, but keeps the DMA shape
    # trivially well-formed).  Arbitrary shapes are fine for pl.ANY refs — no
    # (8, 128) BlockSpec constraint applies because nothing is block-tiled.
    lane = _choose_lane_width(total)
    flat_shape = (total // lane, lane) if lane is not None else (total,)

    x2 = x.reshape(flat_shape)
    out = pl.pallas_call(
        _squeeze_dma_copy_kernel,
        out_shape=jax.ShapeDtypeStruct(flat_shape, x.dtype),
        in_specs=[pl.BlockSpec(memory_space=pl.ANY)],
        out_specs=pl.BlockSpec(memory_space=pl.ANY),
        scratch_shapes=[pltpu.SemaphoreType.DMA],
        cost_estimate=pl.CostEstimate(
            flops=0, transcendentals=0, bytes_accessed=2 * total * itemsize
        ),
    )(x2)

    return out.reshape(squeezed_shape)


if __name__ == "__main__":
    key = jax.random.PRNGKey(0)

    # 1) Typical CIDA usage: (N, C, 1, 1) conv feature map -> (N, C).
    #    Small tensor -> metadata-only reshape fast path (dominant real case).
    x = jax.random.normal(key, (2, 32, 1, 1), dtype=jnp.float32)
    ref = jnp.squeeze(x)
    y = jax.block_until_ready(nn_squeeze(x))
    assert y.shape == ref.shape == (2, 32), (y.shape, ref.shape)
    assert jnp.array_equal(y, ref)

    # 2) Force the Pallas kernel path on a small lane-aligned input (interior
    #    size-1 dims) to validate the HBM->HBM DMA copy end to end.
    x2 = jax.random.normal(jax.random.PRNGKey(1), (2, 1, 16, 1, 4), dtype=jnp.float32)
    ref2 = jnp.squeeze(x2)
    y2 = jax.block_until_ready(nn_squeeze(x2, force_kernel=True))
    assert y2.shape == ref2.shape == (2, 16, 4)
    assert jnp.array_equal(y2, ref2)

    # 3) Larger input that takes the kernel path by default:
    #    2 MiB f32, 128-aligned -> single (512, 1024) HBM->HBM DMA.
    x3 = jax.random.normal(jax.random.PRNGKey(2), (2, 256, 32, 32), dtype=jnp.float32)
    ref3 = jnp.squeeze(x3)
    y3 = jax.block_until_ready(nn_squeeze(x3))
    assert y3.shape == ref3.shape == (2, 256, 32, 32)
    assert jnp.array_equal(y3, ref3)

    print("KERNEL_OK")
</pallas_src>

<mosaic_0001>
module attributes {stable_mosaic.version = 11 : i64} {
  func.func @_squeeze_dma_copy_kernel(%arg0: memref<1x128xf32, #tpu.memory_space<any>>, %arg1: memref<1x128xf32, #tpu.memory_space<any>>, %arg2: memref<!tpu.dma_semaphore, #tpu.memory_space<semaphore_mem>>) attributes {dimension_semantics = [], scalar_prefetch = 0 : i64, scratch_operands = 1 : i64, tpu.core_type = #tpu.core_type<tc>} {
    tpu.enqueue_dma source(%arg0 : memref<1x128xf32, #tpu.memory_space<any>>) target(%arg1 : memref<1x128xf32, #tpu.memory_space<any>>) target_semaphore(%arg2 : memref<!tpu.dma_semaphore, #tpu.memory_space<semaphore_mem>>)
    tpu.wait_dma2 semaphore(%arg2 : memref<!tpu.dma_semaphore, #tpu.memory_space<semaphore_mem>>) src(%arg0 : memref<1x128xf32, #tpu.memory_space<any>>) dst(%arg1 : memref<1x128xf32, #tpu.memory_space<any>>)
    return
  }
}

</mosaic_0001>

<llo_original>
// kernel: tpu_custom_call.1
$region0: #{tpu_custom_call.1}
  #allocation0 [shape = 'u32[]', space=smem, size = 0x4, offset = 0x4, fixed_abs, tag = 'smem constant byte address 0x4 - core index']
  #allocation1 [shape = 'u32[144,128]{1,0:T(1,128)}', space=vmem, size = 0x12000, scoped, tag = 'internal scratch']
  #allocation2 [shape = 's32[1]{0}', space=sflag, size = 0x4, scoped, tag = 'scratch operand']
  #allocation3 [shape = 's32[]', space=sflag, size = 0x4, offset = 0, fixed_abs, tag = 'sflag constant byte address 0x0 - dummy sync flag']
  #allocation4 [shape = 'u32[0]{0}', space=smem, size = 0, offset = 0, fixed_abs, tag = 'smem constant byte address 0x0 - null']
  %s0 = inlined_call_operand.hbm [shape: f32[1,128], index: 0, kind: input, shape index: {}]
  %s1 = inlined_call_operand.hbm [shape: f32[1,128], index: 1, kind: output, shape index: {}]
  %s2 = sld [smem:[#allocation0]]
  $region2: #{tpu_custom_call.1} parent=0
    _
  %s4 = ssub.s32 1, %s2
  %s5 = scalar_select 0, %s4, %s2
  %s7 = sshll.u32 1, 14
  %s8 = sxor.u32 4294967295, %s7
  %12 = dma.general %s0, 16, %s1, [#allocation2], 131072, [#allocation4], 0, 0
  %s13 = smul.u32 1, 1
  %s14 = sshll.u32 %s13, 4
  %15 = dma.done [#allocation2], %s14
  %16 = vsyncmov [#allocation2]
  %s17 = vpop.sfrf %16
  %p18 = scmp.eq.s32.totalorder %s17, 0
  %p19 = pneg %p18
  %21 = shalt.err (%p19)

</llo_original>
